<compile_context>
chip_gen: v7x
topology: tpu7x:2x2x1
jax: 0.10.0
libtpu: 0.0.40
codegen_flags: <defaults>
</compile_context>

<pallas_src>
import functools

import jax
import jax.numpy as jnp
from jax.experimental import pallas as pl
from jax.experimental.pallas import tpu as pltpu


# ----------------------------------------------------------------------------
# Kernel 1: per-feature-map statistics (channel mean + L2-normalized spatial
#           mean of squares), fused so f_t is read from HBM exactly once.
# ----------------------------------------------------------------------------
def _stats_kernel(f_ref, cm_ref, val_ref, *, inv_hw, inv_c, eps):
    f = f_ref[...].astype(jnp.float32)                       # (TB, C, HW)
    # channel_mean = f_t.mean(3).mean(2)
    cm_ref[...] = (jnp.sum(f, axis=2) * inv_hw).astype(cm_ref.dtype)
    # spatial_mean = f_t.pow(2).mean(1).view(bs, -1), then F.normalize(dim=1)
    sp = jnp.sum(f * f, axis=1) * inv_c                      # (TB, HW)
    norm = jnp.sqrt(jnp.sum(sp * sp, axis=1, keepdims=True))
    val_ref[...] = (sp / jnp.maximum(norm, eps)).astype(val_ref.dtype)


def channel_spatial_stats(f, *, eps=1e-12):
    """f: (bs, C, H, W) f32 -> (channel_mean (bs, C), L2-normalized value (bs, H*W))."""
    bs, c, h, w = f.shape
    hw = h * w
    f3 = f.reshape(bs, c, hw)
    tb = 8 if bs % 8 == 0 else bs            # sublane-aligned batch tile when possible
    grid = (bs // tb,)

    kernel = functools.partial(_stats_kernel, inv_hw=1.0 / hw, inv_c=1.0 / c, eps=eps)
    return pl.pallas_call(
        kernel,
        out_shape=(jax.ShapeDtypeStruct((bs, c), jnp.float32),
                   jax.ShapeDtypeStruct((bs, hw), jnp.float32)),
        grid_spec=pltpu.PrefetchScalarGridSpec(
            num_scalar_prefetch=0,
            grid=grid,
            in_specs=[pl.BlockSpec((tb, c, hw), lambda i: (i, 0, 0))],
            out_specs=[pl.BlockSpec((tb, c), lambda i: (i, 0)),
                       pl.BlockSpec((tb, hw), lambda i: (i, 0))],
        ),
        compiler_params=pltpu.CompilerParams(dimension_semantics=("parallel",)),
    )(f3)


# ----------------------------------------------------------------------------
# Kernel 2: nn_bn_relu = Linear (bias-free; bias cancelled by BN) ->
#           BatchNorm1d train-mode batch stats -> optional ReLU.
# Tiled over the (padded, lane-dense) output-feature axis.
# ----------------------------------------------------------------------------
def _nn_bn_kernel(x_ref, w_ref, gamma_ref, beta_ref, o_ref,
                  *, apply_relu: bool, eps: float, inv_b: float):
    # MXU matmul: bf16 operands, f32 accumulation.
    y = jnp.dot(x_ref[...], w_ref[...], preferred_element_type=jnp.float32)  # (B, TN)

    # Train-mode BatchNorm1d over the batch axis (biased variance), one-pass stats.
    mean = jnp.sum(y, axis=0, keepdims=True) * inv_b                         # (1, TN)
    mean_sq = jnp.sum(y * y, axis=0, keepdims=True) * inv_b
    var = jnp.maximum(mean_sq - mean * mean, 0.0)

    # Fused affine epilogue: single FMA over the (B, TN) tile.
    scale = gamma_ref[...] * jax.lax.rsqrt(var + eps)                        # (1, TN)
    shift = beta_ref[...] - mean * scale
    out = y * scale + shift
    if apply_relu:
        out = jnp.maximum(out, 0.0)
    o_ref[...] = out.astype(o_ref.dtype)


def nn_bn_relu_forward(x, w_t, gamma, beta, *, relu=True, eps=1e-5,
                       matmul_dtype=jnp.bfloat16, block_n=128):
    """x: (B, nin); w_t: (nin, nout) (pre-transposed Linear weight);
    gamma/beta: (nout,).  Linear bias is intentionally omitted (cancelled by BN)."""
    b, nin = x.shape
    nout = w_t.shape[1]
    nout_p = pl.cdiv(nout, block_n) * block_n                 # lane-dense padding
    if nout_p != nout:
        w_t = jnp.pad(w_t, ((0, 0), (0, nout_p - nout)))
        gamma = jnp.pad(gamma, ((0, nout_p - nout),), constant_values=1.0)
        beta = jnp.pad(beta, ((0, nout_p - nout),))

    x_mm = x.astype(matmul_dtype)
    w_mm = w_t.astype(matmul_dtype)
    gamma2 = gamma.reshape(1, nout_p).astype(jnp.float32)
    beta2 = beta.reshape(1, nout_p).astype(jnp.float32)

    mm_bytes = jnp.dtype(matmul_dtype).itemsize
    cost = pl.CostEstimate(
        flops=2 * b * nin * nout_p,
        transcendentals=nout_p,
        bytes_accessed=(b * nin + nin * nout_p) * mm_bytes + (b + 2) * nout_p * 4,
    )

    kernel = functools.partial(_nn_bn_kernel, apply_relu=relu, eps=eps, inv_b=1.0 / b)
    out = pl.pallas_call(
        kernel,
        out_shape=jax.ShapeDtypeStruct((b, nout_p), jnp.float32),
        grid_spec=pltpu.PrefetchScalarGridSpec(
            num_scalar_prefetch=0,
            grid=(nout_p // block_n,),
            in_specs=[
                pl.BlockSpec((b, nin), lambda j: (0, 0)),          # full batch (BN stats)
                pl.BlockSpec((nin, block_n), lambda j: (0, j)),    # weight column tile
                pl.BlockSpec((1, block_n), lambda j: (0, j)),      # gamma tile
                pl.BlockSpec((1, block_n), lambda j: (0, j)),      # beta tile
            ],
            out_specs=pl.BlockSpec((b, block_n), lambda j: (0, j)),
        ),
        compiler_params=pltpu.CompilerParams(dimension_semantics=("parallel",)),
        cost_estimate=cost,
    )(x_mm, w_mm, gamma2, beta2)
    return out[:, :nout] if nout_p != nout else out


# ----------------------------------------------------------------------------
# LinearTransformTeacher.forward
# ----------------------------------------------------------------------------
def linear_transform_teacher_forward(g_t, params):
    """g_t: list of (bs, C_i, H_i, W_i) arrays; params[i] = dict(w_t, gamma, beta[, b])."""
    queries, values = [], []
    for f_t, p in zip(g_t, params):
        cm, val = channel_spatial_stats(f_t)
        q = nn_bn_relu_forward(cm, p["w_t"], p["gamma"], p["beta"], relu=False)
        queries.append(q)
        values.append(val)
    query = jnp.stack(queries, axis=1)          # (bs, n_layers, qk_dim)
    return query, values


# ----------------------------------------------------------------------------
# Pure-JAX reference (mirrors the PyTorch module, bias INCLUDED in the Linear)
# ----------------------------------------------------------------------------
def _reference_forward(g_t, params, matmul_dtype=jnp.float32, eps=1e-5):
    bs = g_t[0].shape[0]
    queries, values = [], []
    for f, p in zip(g_t, params):
        cm = jnp.mean(f, axis=(2, 3))
        sp = jnp.mean(f * f, axis=1).reshape(bs, -1)
        y = jnp.dot(cm.astype(matmul_dtype), p["w_t"].astype(matmul_dtype),
                    preferred_element_type=jnp.float32) + p["b"][None, :]
        mu = jnp.mean(y, axis=0, keepdims=True)
        var = jnp.mean((y - mu) ** 2, axis=0, keepdims=True)
        q = (y - mu) / jnp.sqrt(var + eps) * p["gamma"][None, :] + p["beta"][None, :]
        queries.append(q)
        norm = jnp.sqrt(jnp.sum(sp * sp, axis=1, keepdims=True))
        values.append(sp / jnp.maximum(norm, 1e-12))
    return jnp.stack(queries, axis=1), values


if __name__ == "__main__":
    key = jax.random.PRNGKey(0)
    bs, qk_dim = 8, 128
    t_shapes = [(bs, 16, 8, 8), (bs, 32, 4, 4)]    # small stand-ins for args.t_shapes

    keys = jax.random.split(key, 4 * len(t_shapes))
    g_t, params = [], []
    for li, shape in enumerate(t_shapes):
        kf, kw, kb, kg = keys[4 * li: 4 * li + 4]
        g_t.append(jax.random.normal(kf, shape, jnp.float32))
        nin = shape[1]
        bound = 1.0 / jnp.sqrt(jnp.float32(nin))
        W = jax.random.uniform(kw, (qk_dim, nin), jnp.float32, -bound, bound)
        bias = jax.random.uniform(kb, (qk_dim,), jnp.float32, -bound, bound)
        gamma = 1.0 + 0.1 * jax.random.normal(kg, (qk_dim,), jnp.float32)
        beta = 0.1 * jax.random.normal(jax.random.fold_in(kg, 1), (qk_dim,), jnp.float32)
        params.append(dict(w_t=W.T, b=bias, gamma=gamma, beta=beta))

    query, values = linear_transform_teacher_forward(g_t, params)
    query = jax.block_until_ready(query)
    values = [jax.block_until_ready(v) for v in values]
    assert query.shape == (bs, len(t_shapes), qk_dim)

    # Tight check vs a reference using the same bf16-operand matmul (same numerics;
    # bias included there and cancelled by train-mode BN).
    q_ref_bf16, v_ref = _reference_forward(g_t, params, matmul_dtype=jnp.bfloat16)
    assert jnp.allclose(query, q_ref_bf16, atol=1e-3, rtol=1e-3), "query mismatch (bf16 ref)"
    for v, vr in zip(values, v_ref):
        assert jnp.allclose(v, vr, atol=1e-4, rtol=1e-4), "value mismatch"

    # Loose check vs the full-f32 PyTorch-style reference (bf16 matmul adds ~1e-3 noise).
    q_ref_f32, _ = _reference_forward(g_t, params, matmul_dtype=jnp.float32)
    assert jnp.allclose(query, q_ref_f32, atol=5e-2, rtol=5e-2), "query mismatch (f32 ref)"

    print("KERNEL_OK")
</pallas_src>

<mosaic_0001>
module attributes {stable_mosaic.version = 11 : i64} {
  func.func @_stats_kernel(%arg0: i32, %arg1: memref<8x16x64xf32, #tpu.memory_space<vmem>>, %arg2: memref<8x16xf32, #tpu.memory_space<vmem>>, %arg3: memref<8x64xf32, #tpu.memory_space<vmem>>) attributes {dimension_semantics = [#tpu.dimension_semantics<parallel>], iteration_bounds = array<i64: 1>, scalar_prefetch = 0 : i64, scratch_operands = 0 : i64, tpu.core_type = #tpu.core_type<tc>, window_params = [{transform_indices = @transform_0, window_bounds = array<i64: 8, 16, 64>}, {transform_indices = @transform_1, window_bounds = array<i64: 8, 16>}, {transform_indices = @transform_2, window_bounds = array<i64: 8, 64>}]} {
    %c0 = arith.constant 0 : index
    %c0_0 = arith.constant 0 : index
    %c0_1 = arith.constant 0 : index
    %0 = vector.load %arg1[%c0, %c0_0, %c0_1] : memref<8x16x64xf32, #tpu.memory_space<vmem>>, vector<8x16x64xf32>
    %cst = arith.constant dense<0.000000e+00> : vector<8x16xf32>
    %1 = vector.multi_reduction <add>, %0, %cst [2] : vector<8x16x64xf32> to vector<8x16xf32>
    %cst_2 = arith.constant 1.562500e-02 : f32
    %2 = vector.broadcast %cst_2 : f32 to vector<8x16xf32>
    %3 = arith.mulf %1, %2 : vector<8x16xf32>
    %c0_3 = arith.constant 0 : index
    %c0_4 = arith.constant 0 : index
    %4 = vector.load %arg2[%c0_3, %c0_4] : memref<8x16xf32, #tpu.memory_space<vmem>>, vector<8x16xf32>
    tpu.vector_store %arg2[%c0_3, %c0_4], %3 {strides = array<i32>} : memref<8x16xf32, #tpu.memory_space<vmem>>, vector<8x16xf32>,
    %5 = arith.mulf %0, %0 : vector<8x16x64xf32>
    %cst_5 = arith.constant dense<0.000000e+00> : vector<8x64xf32>
    %6 = vector.multi_reduction <add>, %5, %cst_5 [1] : vector<8x16x64xf32> to vector<8x64xf32>
    %cst_6 = arith.constant 6.250000e-02 : f32
    %7 = vector.broadcast %cst_6 : f32 to vector<8x64xf32>
    %8 = arith.mulf %6, %7 : vector<8x64xf32>
    %9 = arith.mulf %8, %8 : vector<8x64xf32>
    %cst_7 = arith.constant dense<0.000000e+00> : vector<8xf32>
    %10 = vector.multi_reduction <add>, %9, %cst_7 [1] : vector<8x64xf32> to vector<8xf32>
    %11 = vector.shape_cast %10 : vector<8xf32> to vector<8x1xf32>
    %12 = math.sqrt %11 : vector<8x1xf32>
    %cst_8 = arith.constant 9.99999996E-13 : f32
    %13 = vector.broadcast %cst_8 : f32 to vector<8x1xf32>
    %14 = arith.maximumf %12, %13 : vector<8x1xf32>
    %15 = vector.broadcast %14 : vector<8x1xf32> to vector<8x64xf32>
    %16 = arith.divf %8, %15 : vector<8x64xf32>
    %c0_9 = arith.constant 0 : index
    %c0_10 = arith.constant 0 : index
    %17 = vector.load %arg3[%c0_9, %c0_10] : memref<8x64xf32, #tpu.memory_space<vmem>>, vector<8x64xf32>
    tpu.vector_store %arg3[%c0_9, %c0_10], %16 {strides = array<i32>} : memref<8x64xf32, #tpu.memory_space<vmem>>, vector<8x64xf32>,
    return
  }
  func.func @transform_0(%arg0: i32) -> (i32, i32, i32) {
    %c0_i32 = arith.constant 0 : i32
    %c0_i32_0 = arith.constant 0 : i32
    %c0_i32_1 = arith.constant 0 : i32
    return %arg0, %c0_i32, %c0_i32_0 : i32, i32, i32
  }
  func.func @transform_1(%arg0: i32) -> (i32, i32) {
    %c0_i32 = arith.constant 0 : i32
    %c0_i32_0 = arith.constant 0 : i32
    return %arg0, %c0_i32 : i32, i32
  }
  func.func @transform_2(%arg0: i32) -> (i32, i32) {
    %c0_i32 = arith.constant 0 : i32
    %c0_i32_0 = arith.constant 0 : i32
    return %arg0, %c0_i32 : i32, i32
  }
}

</mosaic_0001>

<llo_original>
// kernel: tpu_custom_call.1
$region0: #{tpu_custom_call.1}
  #allocation0 [shape = 'u32[]', space=smem, size = 0x4, offset = 0x4, fixed_abs, tag = 'smem constant byte address 0x4 - core index']
  #allocation1 [shape = 'u32[144,128]{1,0:T(1,128)}', space=vmem, size = 0x12000, scoped, tag = 'internal scratch']
  %s0 = inlined_call_operand.hbm [shape: f32[8,16,64], index: 0, kind: input, shape index: {}]
  %s1 = inlined_call_operand.hbm [shape: f32[8,16], index: 1, kind: output, shape index: {0}]
  %s2 = inlined_call_operand.hbm [shape: f32[8,64], index: 2, kind: output, shape index: {1}]
  %3 = xla_tuple %s1, %s2
  %s4 = sld [smem:[#allocation0]]
  $region26: #{tpu_custom_call.1} parent=0
    _
  %s6 = ssub.s32 1, %s4
  %s7 = scalar_select 0, %s6, %s4
  $region1: #{tpu_custom_call.1} parent=0
    #allocation2 [shape = 'u8[65536]{0}', space=vmem, size = 0x10000, scoped, tag = 'input window, operand 0, single buffered']
    #allocation3 [shape = 's32[1]{0}', space=sflag, size = 0x4, scoped, tag = 'scoped memory for tpu_custom_call.1']
    #allocation4 [shape = 's32[1]{0}', space=sflag, size = 0x4, scoped, tag = 'scoped memory for tpu_custom_call.1']
    #allocation5 [shape = 'u8[4096]{0}', space=vmem, size = 0x1000, scoped, tag = 'output window, operand 0, single buffered']
    #allocation6 [shape = 'u8[4096]{0}', space=vmem, size = 0x1000, scoped, tag = 'output window, operand 1, single buffered']
    #allocation7 [shape = 's32[1]{0}', space=sflag, size = 0x4, scoped, tag = 'scoped memory for tpu_custom_call.1']
    %8 = vsyncpa [#allocation3], 0
    %9 = vsyncpa [#allocation4], 0
    %10 = vsyncpa [#allocation7], 0
    // Predicated region
    $region2: #{tpu_custom_call.1} parent=1 // pred_check
      _
    $region3: #{tpu_custom_call.1} parent=1 // pred_check_branch
      %12 = sbr.rel (0) target = $region5
    $region4: #{tpu_custom_call.1} parent=1 // pred_region
      %s14 = ssub.s32 2048, 2048
      %15 = vsyncadd [#allocation3], %s14
      %s16 = sshll.u32 [#allocation2], 4
      %s17 = int_to_ptr.vmem [resolvable:$true] %s16
      %22 = dma.hbm_to_vmem [thread:$0]  %s0, 2048, %s17, [#allocation3], 128, 128, 8
    $region5: #{tpu_custom_call.1} parent=1 // pred_fallthru
      _
    // Predicated region
    $region6: #{tpu_custom_call.1} parent=1 // pred_check
      _
    $region7: #{tpu_custom_call.1} parent=1 // pred_check_branch
      %24 = sbr.rel (0) target = $region9
    $region8: #{tpu_custom_call.1} parent=1 // pred_region
      %25 = dma.done [#allocation3], 2048
    $region9: #{tpu_custom_call.1} parent=1 // pred_fallthru
      _
    %v26 = vld [vmem:[#allocation2] sm:$0xff]
    %v27 = vld [vmem:[#allocation2 + $0x8] sm:$0xff]
    %v28 = vld [vmem:[#allocation2 + $0x10] sm:$0xff]
    %v29 = vld [vmem:[#allocation2 + $0x18] sm:$0xff]
    %v30 = vld [vmem:[#allocation2 + $0x20] sm:$0xff]
    %v31 = vld [vmem:[#allocation2 + $0x28] sm:$0xff]
    %v32 = vld [vmem:[#allocation2 + $0x30] sm:$0xff]
    %v33 = vld [vmem:[#allocation2 + $0x38] sm:$0xff]
    %v34 = vld [vmem:[#allocation2 + $0x40] sm:$0xff]
    %v35 = vld [vmem:[#allocation2 + $0x48] sm:$0xff]
    %v36 = vld [vmem:[#allocation2 + $0x50] sm:$0xff]
    %v37 = vld [vmem:[#allocation2 + $0x58] sm:$0xff]
    %v38 = vld [vmem:[#allocation2 + $0x60] sm:$0xff]
    %v39 = vld [vmem:[#allocation2 + $0x68] sm:$0xff]
    %v40 = vld [vmem:[#allocation2 + $0x70] sm:$0xff]
    %v41 = vld [vmem:[#allocation2 + $0x78] sm:$0xff]
    %vm42 = vcmask 523264
    %v43 = vsel %vm42, %v26, 0.0
    %44 = vadd.xlane.f32.xlu0 %v43
    %v45 = vpop.xlane.xlu0 %44
    %v46 = vsel %vm42, %v27, 0.0
    %47 = vadd.xlane.f32.xlu0 %v46
    %v48 = vpop.xlane.xlu0 %47
    %v49 = vsel %vm42, %v28, 0.0
    %50 = vadd.xlane.f32.xlu0 %v49
    %v51 = vpop.xlane.xlu0 %50
    %v52 = vsel %vm42, %v29, 0.0
    %53 = vadd.xlane.f32.xlu0 %v52
    %v54 = vpop.xlane.xlu0 %53
    %v55 = vsel %vm42, %v30, 0.0
    %56 = vadd.xlane.f32.xlu0 %v55
    %v57 = vpop.xlane.xlu0 %56
    %v58 = vsel %vm42, %v31, 0.0
    %59 = vadd.xlane.f32.xlu0 %v58
    %v60 = vpop.xlane.xlu0 %59
    %v61 = vsel %vm42, %v32, 0.0
    %62 = vadd.xlane.f32.xlu0 %v61
    %v63 = vpop.xlane.xlu0 %62
    %v64 = vsel %vm42, %v33, 0.0
    %65 = vadd.xlane.f32.xlu0 %v64
    %v66 = vpop.xlane.xlu0 %65
    %v67 = vsel %vm42, %v34, 0.0
    %68 = vadd.xlane.f32.xlu0 %v67
    %v69 = vpop.xlane.xlu0 %68
    %v70 = vsel %vm42, %v35, 0.0
    %71 = vadd.xlane.f32.xlu0 %v70
    %v72 = vpop.xlane.xlu0 %71
    %v73 = vsel %vm42, %v36, 0.0
    %74 = vadd.xlane.f32.xlu0 %v73
    %v75 = vpop.xlane.xlu0 %74
    %v76 = vsel %vm42, %v37, 0.0
    %77 = vadd.xlane.f32.xlu0 %v76
    %v78 = vpop.xlane.xlu0 %77
    %v79 = vsel %vm42, %v38, 0.0
    %80 = vadd.xlane.f32.xlu0 %v79
    %v81 = vpop.xlane.xlu0 %80
    %v82 = vsel %vm42, %v39, 0.0
    %83 = vadd.xlane.f32.xlu0 %v82
    %v84 = vpop.xlane.xlu0 %83
    %v85 = vsel %vm42, %v40, 0.0
    %86 = vadd.xlane.f32.xlu0 %v85
    %v87 = vpop.xlane.xlu0 %86
    %v88 = vsel %vm42, %v41, 0.0
    %89 = vadd.xlane.f32.xlu0 %v88
    %v90 = vpop.xlane.xlu0 %89
    %v91 = vmul.f32 %v45, 0.015625
    %v92 = vmul.f32 %v48, 0.015625
    %v93 = vmul.f32 %v51, 0.015625
    %v94 = vmul.f32 %v54, 0.015625
    %v95 = vmul.f32 %v57, 0.015625
    %v96 = vmul.f32 %v60, 0.015625
    %v97 = vmul.f32 %v63, 0.015625
    %v98 = vmul.f32 %v66, 0.015625
    %v99 = vmul.f32 %v69, 0.015625
    %v100 = vmul.f32 %v72, 0.015625
    %v101 = vmul.f32 %v75, 0.015625
    %v102 = vmul.f32 %v78, 0.015625
    %v103 = vmul.f32 %v81, 0.015625
    %v104 = vmul.f32 %v84, 0.015625
    %v105 = vmul.f32 %v87, 0.015625
    %v106 = vmul.f32 %v90, 0.015625
    %v123 = vlaneseq
    %v124 = vand.u32 %v123, 127
    %v125 = vlaneseq
    %v126 = vshrl.u32 %v125, 7
    %v127 = vsub.s32 %v124, %v126
    %v128 = vrot.slane %v91, %v127
    %v129 = vadd.s32 %v124, 4294967288
    %v130 = vlaneseq
    %v131 = vshrl.u32 %v130, 7
    %v132 = vsub.s32 %v129, %v131
    %v133 = vrot.slane %v92, %v132
    %vm134 = vcmask 130112
    %v135 = vsel %vm134, %v133, %v128
    %v136 = vlaneseq
    %v137 = vshrl.u32 %v136, 7
    %v138 = vsub.s32 %v124, %v137
    %v139 = vrot.slane %v93, %v138
    %v140 = vlaneseq
    %v141 = vshrl.u32 %v140, 7
    %v142 = vsub.s32 %v129, %v141
    %v143 = vrot.slane %v94, %v142
    %v144 = vsel %vm134, %v143, %v139
    %v145 = vlaneseq
    %v146 = vshrl.u32 %v145, 7
    %v147 = vsub.s32 %v124, %v146
    %v148 = vrot.slane %v95, %v147
    %v149 = vlaneseq
    %v150 = vshrl.u32 %v149, 7
    %v151 = vsub.s32 %v129, %v150
    %v152 = vrot.slane %v96, %v151
    %v153 = vsel %vm134, %v152, %v148
    %v154 = vlaneseq
    %v155 = vshrl.u32 %v154, 7
    %v156 = vsub.s32 %v124, %v155
    %v157 = vrot.slane %v97, %v156
    %v158 = vlaneseq
    %v159 = vshrl.u32 %v158, 7
    %v160 = vsub.s32 %v129, %v159
    %v161 = vrot.slane %v98, %v160
    %v162 = vsel %vm134, %v161, %v157
    %v163 = vlaneseq
    %v164 = vshrl.u32 %v163, 7
    %v165 = vsub.s32 %v124, %v164
    %v166 = vrot.slane %v99, %v165
    %v167 = vlaneseq
    %v168 = vshrl.u32 %v167, 7
    %v169 = vsub.s32 %v129, %v168
    %v170 = vrot.slane %v100, %v169
    %v171 = vsel %vm134, %v170, %v166
    %v172 = vlaneseq
    %v173 = vshrl.u32 %v172, 7
    %v174 = vsub.s32 %v124, %v173
    %v175 = vrot.slane %v101, %v174
    %v176 = vlaneseq
    %v177 = vshrl.u32 %v176, 7
    %v178 = vsub.s32 %v129, %v177
    %v179 = vrot.slane %v102, %v178
    %v180 = vsel %vm134, %v179, %v175
    %v181 = vlaneseq
    %v182 = vshrl.u32 %v181, 7
    %v183 = vsub.s32 %v124, %v182
    %v184 = vrot.slane %v103, %v183
    %v185 = vlaneseq
    %v186 = vshrl.u32 %v185, 7
    %v187 = vsub.s32 %v129, %v186
    %v188 = vrot.slane %v104, %v187
    %v189 = vsel %vm134, %v188, %v184
    %v190 = vlaneseq
    %v191 = vshrl.u32 %v190, 7
    %v192 = vsub.s32 %v124, %v191
    %v193 = vrot.slane %v105, %v192
    %v194 = vlaneseq
    %v195 = vshrl.u32 %v194, 7
    %v196 = vsub.s32 %v129, %v195
    %v197 = vrot.slane %v106, %v196
    %v198 = vsel %vm134, %v197, %v193
    %vm199 = vcmask 1041409
    %v200 = vsel %vm199, %v144, %v135
    %vm201 = vcmask 1042434
    %v202 = vsel %vm201, %v153, %v200
    %vm203 = vcmask 1043459
    %v204 = vsel %vm203, %v162, %v202
    %vm205 = vcmask 1044484
    %v206 = vsel %vm205, %v171, %v204
    %vm207 = vcmask 1045509
    %v208 = vsel %vm207, %v180, %v206
    %vm209 = vcmask 1046534
    %v210 = vsel %vm209, %v189, %v208
    %vm211 = vcmask 1047559
    %v212 = vsel %vm211, %v198, %v210
    %vm214 = vcmask 130048
    %215 = vst.msk [vmem:[#allocation5] sm:$0xff] %vm214, %v212
    %v216 = vmul.f32 %v26, %v26
    %v217 = vmul.f32 %v27, %v27
    %v218 = vmul.f32 %v28, %v28
    %v219 = vmul.f32 %v29, %v29
    %v220 = vmul.f32 %v30, %v30
    %v221 = vmul.f32 %v31, %v31
    %v222 = vmul.f32 %v32, %v32
    %v223 = vmul.f32 %v33, %v33
    %v224 = vmul.f32 %v34, %v34
    %v225 = vmul.f32 %v35, %v35
    %v226 = vmul.f32 %v36, %v36
    %v227 = vmul.f32 %v37, %v37
    %v228 = vmul.f32 %v38, %v38
    %v229 = vmul.f32 %v39, %v39
    %v230 = vmul.f32 %v40, %v40
    %v231 = vmul.f32 %v41, %v41
    %v232 = vsel %vm42, %v216, 0.0
    %v233 = vsel %vm42, %v217, 0.0
    %v234 = vadd.f32 %v232, %v233
    %v235 = vrot.slane %v234, 4
    %v236 = vadd.f32 %v234, %v235
    %v237 = vrot.slane %v236, 2
    %v238 = vadd.f32 %v236, %v237
    %v239 = vrot.slane %v238, 1
    %v240 = vadd.f32 %v238, %v239
    %v241 = vsel %vm42, %v218, 0.0
    %v242 = vsel %vm42, %v219, 0.0
    %v243 = vadd.f32 %v241, %v242
    %v244 = vrot.slane %v243, 4
    %v245 = vadd.f32 %v243, %v244
    %v246 = vrot.slane %v245, 2
    %v247 = vadd.f32 %v245, %v246
    %v248 = vrot.slane %v247, 1
    %v249 = vadd.f32 %v247, %v248
    %v250 = vsel %vm42, %v220, 0.0
    %v251 = vsel %vm42, %v221, 0.0
    %v252 = vadd.f32 %v250, %v251
    %v253 = vrot.slane %v252, 4
    %v254 = vadd.f32 %v252, %v253
    %v255 = vrot.slane %v254, 2
    %v256 = vadd.f32 %v254, %v255
    %v257 = vrot.slane %v256, 1
    %v258 = vadd.f32 %v256, %v257
    %v259 = vsel %vm42, %v222, 0.0
    %v260 = vsel %vm42, %v223, 0.0
    %v261 = vadd.f32 %v259, %v260
    %v262 = vrot.slane %v261, 4
    %v263 = vadd.f32 %v261, %v262
    %v264 = vrot.slane %v263, 2
    %v265 = vadd.f32 %v263, %v264
    %v266 = vrot.slane %v265, 1
    %v267 = vadd.f32 %v265, %v266
    %v268 = vsel %vm42, %v224, 0.0
    %v269 = vsel %vm42, %v225, 0.0
    %v270 = vadd.f32 %v268, %v269
    %v271 = vrot.slane %v270, 4
    %v272 = vadd.f32 %v270, %v271
    %v273 = vrot.slane %v272, 2
    %v274 = vadd.f32 %v272, %v273
    %v275 = vrot.slane %v274, 1
    %v276 = vadd.f32 %v274, %v275
    %v277 = vsel %vm42, %v226, 0.0
    %v278 = vsel %vm42, %v227, 0.0
    %v279 = vadd.f32 %v277, %v278
    %v280 = vrot.slane %v279, 4
    %v281 = vadd.f32 %v279, %v280
    %v282 = vrot.slane %v281, 2
    %v283 = vadd.f32 %v281, %v282
    %v284 = vrot.slane %v283, 1
    %v285 = vadd.f32 %v283, %v284
    %v286 = vsel %vm42, %v228, 0.0
    %v287 = vsel %vm42, %v229, 0.0
    %v288 = vadd.f32 %v286, %v287
    %v289 = vrot.slane %v288, 4
    %v290 = vadd.f32 %v288, %v289
    %v291 = vrot.slane %v290, 2
    %v292 = vadd.f32 %v290, %v291
    %v293 = vrot.slane %v292, 1
    %v294 = vadd.f32 %v292, %v293
    %v295 = vsel %vm42, %v230, 0.0
    %v296 = vsel %vm42, %v231, 0.0
    %v297 = vadd.f32 %v295, %v296
    %v298 = vrot.slane %v297, 4
    %v299 = vadd.f32 %v297, %v298
    %v300 = vrot.slane %v299, 2
    %v301 = vadd.f32 %v299, %v300
    %v302 = vrot.slane %v301, 1
    %v303 = vadd.f32 %v301, %v302
    %v304 = vmul.f32 %v240, 0.0625
    %v305 = vmul.f32 %v249, 0.0625
    %v306 = vmul.f32 %v258, 0.0625
    %v307 = vmul.f32 %v267, 0.0625
    %v308 = vmul.f32 %v276, 0.0625
    %v309 = vmul.f32 %v285, 0.0625
    %v310 = vmul.f32 %v294, 0.0625
    %v311 = vmul.f32 %v303, 0.0625
    %v312 = vmul.f32 %v304, %v304
    %v313 = vmul.f32 %v305, %v305
    %v314 = vmul.f32 %v306, %v306
    %v315 = vmul.f32 %v307, %v307
    %v316 = vmul.f32 %v308, %v308
    %v317 = vmul.f32 %v309, %v309
    %v318 = vmul.f32 %v310, %v310
    %v319 = vmul.f32 %v311, %v311
    %v328 = vsel %vm199, %v313, %v312
    %v329 = vsel %vm201, %v314, %v328
    %v330 = vsel %vm203, %v315, %v329
    %v331 = vsel %vm205, %v316, %v330
    %v332 = vsel %vm207, %v317, %v331
    %v333 = vsel %vm209, %v318, %v332
    %v334 = vsel %vm211, %v319, %v333
    %v336 = vsel %vm42, %v334, 0.0
    %337 = vadd.xlane.f32.xlu0 %v336
    %v338 = vpop.xlane.xlu0 %337
    %v339 = vrsqrt.pop %v338
    %v340 = vmul.f32 %v338, %v339
    %vm341 = vcmp.eq.f32.partialorder %v338, inf
    %v342 = vsel %vm341, %v338, %v340
    %vm343 = vcmp.eq.f32.partialorder %v338, 0.0
    %v344 = vand.u32 %v338, 2147483648
    %v345 = vsel %vm343, %v344, %v342
    %v346 = vmax.f32 %v345, 1e-12
    %v348 = vrot.slane %v346, 1
    %v349 = vrot.slane %v346, 2
    %v350 = vrot.slane %v346, 3
    %v351 = vrot.slane %v346, 4
    %v352 = vrot.slane %v346, 5
    %v353 = vrot.slane %v346, 6
    %v354 = vrot.slane %v346, 7
    %v363 = vrcp.pop %v346
    %v364 = vmul.f32 %v304, %v363
    %v365 = vrcp.pop %v348
    %v366 = vmul.f32 %v305, %v365
    %v367 = vrcp.pop %v349
    %v368 = vmul.f32 %v306, %v367
    %v369 = vrcp.pop %v350
    %v370 = vmul.f32 %v307, %v369
    %v371 = vrcp.pop %v351
    %v372 = vmul.f32 %v308, %v371
    %v373 = vrcp.pop %v352
    %v374 = vmul.f32 %v309, %v373
    %v375 = vrcp.pop %v353
    %v376 = vmul.f32 %v310, %v375
    %v377 = vrcp.pop %v354
    %v378 = vmul.f32 %v311, %v377
    %v387 = vrot.slane %v366, 7
    %v388 = vsel %vm199, %v387, %v364
    %v389 = vrot.slane %v368, 6
    %v390 = vsel %vm201, %v389, %v388
    %v391 = vrot.slane %v370, 5
    %v392 = vsel %vm203, %v391, %v390
    %v393 = vrot.slane %v372, 4
    %v394 = vsel %vm205, %v393, %v392
    %v395 = vrot.slane %v374, 3
    %v396 = vsel %vm207, %v395, %v394
    %v397 = vrot.slane %v376, 2
    %v398 = vsel %vm209, %v397, %v396
    %v399 = vrot.slane %v378, 1
    %v400 = vsel %vm211, %v399, %v398
    %402 = vst.msk [vmem:[#allocation6] sm:$0xff] %vm42, %v400
    // Predicated region
    $region10: #{tpu_custom_call.1} parent=1 // pred_check
      _
    $region11: #{tpu_custom_call.1} parent=1 // pred_check_branch
      %404 = sbr.rel (0) target = $region13
    $region12: #{tpu_custom_call.1} parent=1 // pred_region
      %s406 = ssub.s32 128, 128
      %407 = vsyncadd [#allocation4], %s406
      %s409 = sshll.u32 [#allocation5], 4
      %s410 = int_to_ptr.vmem [resolvable:$true] %s409
      %412 = dma.vmem_to_hbm [thread:$0]  %s410, 128, %s1, [#allocation4]
    $region13: #{tpu_custom_call.1} parent=1 // pred_fallthru
      _
    // Predicated region
    $region14: #{tpu_custom_call.1} parent=1 // pred_check
      _
    $region15: #{tpu_custom_call.1} parent=1 // pred_check_branch
      %414 = sbr.rel (0) target = $region17
    $region16: #{tpu_custom_call.1} parent=1 // pred_region
      %s416 = ssub.s32 128, 128
      %417 = vsyncadd [#allocation7], %s416
      %s419 = sshll.u32 [#allocation6], 4
      %s420 = int_to_ptr.vmem [resolvable:$true] %s419
      %422 = dma.vmem_to_hbm [thread:$0]  %s420, 128, %s2, [#allocation7]
    $region17: #{tpu_custom_call.1} parent=1 // pred_fallthru
      _
    // Predicated region
    $region18: #{tpu_custom_call.1} parent=1 // pred_check
      _
    $region19: #{tpu_custom_call.1} parent=1 // pred_check_branch
      %424 = sbr.rel (0) target = $region21
    $region20: #{tpu_custom_call.1} parent=1 // pred_region
      %425 = dma.done [#allocation4], 128
    $region21: #{tpu_custom_call.1} parent=1 // pred_fallthru
      _
    // Predicated region
    $region22: #{tpu_custom_call.1} parent=1 // pred_check
      _
    $region23: #{tpu_custom_call.1} parent=1 // pred_check_branch
      %427 = sbr.rel (0) target = $region25
    $region24: #{tpu_custom_call.1} parent=1 // pred_region
      %428 = dma.done [#allocation7], 128
    $region25: #{tpu_custom_call.1} parent=1 // pred_fallthru
      _
    %429 = vsyncpa [#allocation3], 1
    %430 = vsyncpa [#allocation4], 1
    %431 = vsyncpa [#allocation7], 1

</llo_original>
